<compile_context>
chip_gen: v7x
topology: tpu7x:2x2x1
jax: 0.10.0
libtpu: 0.0.40
codegen_flags: <defaults>
</compile_context>

<pallas_src>
import functools

import jax
import jax.numpy as jnp
from jax.experimental import pallas as pl
from jax.experimental.pallas import tpu as pltpu


def _cdiv(a, b):
    return -(-a // b)


def _round_up(x, m):
    return ((x + m - 1) // m) * m


def _leaky_relu(x, slope=0.2):
    return jnp.where(x >= 0, x, slope * x)


# ----------------------------- Pallas kernel --------------------------------

def actor_kernel(x_ref, w_ref, b_ref, out_ref, *, action_space, k1):
    """One batch tile of the full actor MLP.

    x_ref  : (Bt, K1)          f32   flattened obs, K1 = round_up(d_in, 16)
    w_ref  : (4*K1 + 768, 128) bf16  packed weights:
               rows [c*K1,(c+1)*K1)      : layer-1 column chunk c (c = 0..3)
               rows [4*K1, 4*K1+512)     : layer-2 (512 -> 128)
               rows [4*K1+512, 4*K1+640) : layer-3 (128 -> 128, cols >= 50 zero)
               rows [4*K1+640, 4*K1+768) : fused mean||var head (rows >= 50 zero)
    b_ref  : (4, 512)          f32   row0=b1(512 lanes), row1=b2, row2=b3, row3=bh
    out_ref: (Bt, 128)         bf16  lanes [0,A)=mean, [A,2A)=sigmoid(var logits)
    """
    cdt = w_ref.dtype                                   # bf16 matmul inputs
    xb = x_ref[...].astype(cdt)                         # (Bt, K1)

    # ---- layers 1 + 2, fused over four 128-lane chunks ----------------------
    #   h2 = b2 + sum_c LeakyReLU(x @ W1_c + b1_c) @ W2_c
    r2 = 4 * k1
    h2 = b_ref[1:2, 0:128]                              # (1,128) f32, broadcasts
    for c in range(4):                                  # static, unrolled
        h1_c = jnp.dot(xb, w_ref[c * k1:(c + 1) * k1, :],
                       preferred_element_type=jnp.float32)
        h1_c = _leaky_relu(h1_c + b_ref[0:1, c * 128:(c + 1) * 128])
        h2 = h2 + jnp.dot(h1_c.astype(cdt),
                          w_ref[r2 + c * 128:r2 + (c + 1) * 128, :],
                          preferred_element_type=jnp.float32)
    h2 = _leaky_relu(h2)                                # (Bt, 128)

    # ---- layer 3 ------------------------------------------------------------
    r3 = r2 + 512
    h3 = jnp.dot(h2.astype(cdt), w_ref[r3:r3 + 128, :],
                 preferred_element_type=jnp.float32) + b_ref[2:3, 0:128]
    h3 = _leaky_relu(h3)                                # (Bt, 128); lanes>=50 stay 0

    # ---- fused mean || var head --------------------------------------------
    rh = r3 + 128
    y = jnp.dot(h3.astype(cdt), w_ref[rh:rh + 128, :],
                preferred_element_type=jnp.float32) + b_ref[3:4, 0:128]

    # Sigmoid only on the variance lanes [A, 2A); store stays lane-dense.
    lane = jax.lax.broadcasted_iota(jnp.int32, y.shape, 1)
    is_var = (lane >= action_space) & (lane < 2 * action_space)
    out_ref[...] = jnp.where(is_var, jax.nn.sigmoid(y), y).astype(out_ref.dtype)


# ------------------------------ Wrapper --------------------------------------

def actor_forward(obs, params, action_space, *, out_dtype=jnp.bfloat16):
    """obs: (batch, buffer_length, observation_space) f32 -> (mean, var) f32."""
    wpack, bpack = params
    k1 = (wpack.shape[0] - 768) // 4
    out_lanes = 128

    batch = obs.shape[0]
    x = obs.reshape(batch, -1).astype(jnp.float32)      # nn.Flatten()
    d_in = x.shape[1]
    assert d_in <= k1, "weight pack was built for a smaller observation size"

    # Balanced batch tiles (multiple of 16 rows), max 1024 rows per tile, and
    # >=2 (even) grid steps once batch >= 512 so v7x's two TCs both get work.
    MAX_TILE = 1024
    num_tiles = _cdiv(batch, MAX_TILE)
    if batch >= 512:
        num_tiles = max(num_tiles, 2)
        num_tiles += num_tiles % 2
    b_tile = _round_up(_cdiv(batch, num_tiles), 16)
    b_pad = b_tile * num_tiles

    x = jnp.pad(x, ((0, b_pad - batch), (0, k1 - d_in)))

    const = lambda i: (0, 0)        # weights/biases: DMA once, VMEM-resident
    cost = pl.CostEstimate(
        flops=2 * b_pad * (k1 * 512 + 512 * 128 + 2 * 128 * 128),
        transcendentals=b_pad * out_lanes,
        bytes_accessed=int(b_pad * k1 * 4 + wpack.size * 2 + bpack.size * 4
                           + b_pad * out_lanes * jnp.dtype(out_dtype).itemsize),
    )

    out = pl.pallas_call(
        functools.partial(actor_kernel, action_space=action_space, k1=k1),
        out_shape=jax.ShapeDtypeStruct((b_pad, out_lanes), out_dtype),
        grid=(num_tiles,),
        in_specs=[
            pl.BlockSpec((b_tile, k1), lambda i: (i, 0)),
            pl.BlockSpec(wpack.shape, const),
            pl.BlockSpec(bpack.shape, const),
        ],
        out_specs=pl.BlockSpec((b_tile, out_lanes), lambda i: (i, 0)),
        compiler_params=pltpu.CompilerParams(
            dimension_semantics=("parallel",)),
        cost_estimate=cost,
    )(x, wpack, bpack)

    mean = out[:batch, :action_space].astype(jnp.float32)
    var = out[:batch, action_space:2 * action_space].astype(jnp.float32)
    return mean, var


# --------------------------- Parameter init -----------------------------------

def init_params(key, observation_space, buffer_length, action_space,
                weight_dtype=jnp.bfloat16):
    """PyTorch-equivalent init (orthogonal weights, U(+-1/sqrt(fan_in)) bias),
    packed into ONE bf16 weight buffer + ONE f32 bias buffer (3 input DMAs per
    call).  Zero-padding never changes the math: padded input rows multiply
    zeros, padded outputs stay zero through LeakyReLU (their biases are zero)."""
    d_in = observation_space * buffer_length
    k1 = _round_up(d_in, 16)
    a = action_space
    assert 2 * a <= 128, "fused mean||var head assumes 2*action_space <= 128"

    orth = jax.nn.initializers.orthogonal()

    def raw_linear(k, fan_in, fan_out):
        kw, kb = jax.random.split(k)
        # nn.init.orthogonal_ on the PyTorch (out, in) weight; store transpose.
        w = orth(kw, (fan_out, fan_in), jnp.float32).T            # (in, out)
        bound = 1.0 / (fan_in ** 0.5)
        b = jax.random.uniform(kb, (fan_out,), jnp.float32, -bound, bound)
        return w, b

    keys = jax.random.split(key, 5)
    w1, b1 = raw_linear(keys[0], d_in, 500)
    w2, b2 = raw_linear(keys[1], 500, 100)
    w3, b3 = raw_linear(keys[2], 100, 50)
    w4, b4 = raw_linear(keys[3], 50, a)          # mean head
    w5, b5 = raw_linear(keys[4], 50, a)          # var head

    # Zero-padded per-layer matrices (all 128 lanes wide except layer-1).
    w1p = jnp.zeros((k1, 512), jnp.float32).at[:d_in, :500].set(w1)
    w2p = jnp.zeros((512, 128), jnp.float32).at[:500, :100].set(w2)
    w3p = jnp.zeros((128, 128), jnp.float32).at[:100, :50].set(w3)
    whp = (jnp.zeros((128, 128), jnp.float32)
           .at[:50, :a].set(w4).at[:50, a:2 * a].set(w5))

    # Packed weight buffer: layer-1 as four 128-lane column chunks, then
    # layer-2, layer-3 and the fused head.  All sublane offsets are 16-aligned
    # (bf16 tile = (16,128)), so in-kernel static slices are free.
    wpack = jnp.zeros((4 * k1 + 768, 128), jnp.float32)
    for c in range(4):
        wpack = wpack.at[c * k1:(c + 1) * k1, :].set(w1p[:, c * 128:(c + 1) * 128])
    wpack = wpack.at[4 * k1:4 * k1 + 512, :].set(w2p)
    wpack = wpack.at[4 * k1 + 512:4 * k1 + 640, :].set(w3p)
    wpack = wpack.at[4 * k1 + 640:4 * k1 + 768, :].set(whp)

    bpack = jnp.zeros((4, 512), jnp.float32)
    bpack = bpack.at[0, :500].set(b1)
    bpack = bpack.at[1, :100].set(b2)
    bpack = bpack.at[2, :50].set(b3)
    bpack = bpack.at[3, :a].set(b4).at[3, a:2 * a].set(b5)

    return wpack.astype(weight_dtype), bpack


# ----------------------------- Reference --------------------------------------

def actor_reference(obs, params, action_space):
    """Pure-JAX reference mirroring the kernel's bf16 matmul-input rounding
    (weights are already bf16-valued); output kept in f32."""
    wpack, bpack = params
    k1 = (wpack.shape[0] - 768) // 4
    w = wpack.astype(jnp.float32)
    w1 = jnp.concatenate([w[c * k1:(c + 1) * k1] for c in range(4)], axis=1)
    w2 = w[4 * k1:4 * k1 + 512]
    w3 = w[4 * k1 + 512:4 * k1 + 640]
    wh = w[4 * k1 + 640:4 * k1 + 768]
    b1, b2, b3, bh = bpack[0], bpack[1, :128], bpack[2, :128], bpack[3, :128]

    q = lambda v: v.astype(jnp.bfloat16).astype(jnp.float32)   # matmul-input rounding
    lrelu = lambda h: jnp.where(h >= 0, h, 0.2 * h)

    batch = obs.shape[0]
    x = obs.reshape(batch, -1).astype(jnp.float32)
    x = jnp.pad(x, ((0, 0), (0, k1 - x.shape[1])))

    h = lrelu(q(x) @ w1 + b1)
    h = lrelu(q(h) @ w2 + b2)
    h = lrelu(q(h) @ w3 + b3)
    y = q(h) @ wh + bh
    mean = y[:, :action_space]
    var = jax.nn.sigmoid(y[:, action_space:2 * action_space])
    return mean, var


# -------------------------------- Main -----------------------------------------

if __name__ == "__main__":
    observation_space = 8
    buffer_length = 4
    action_space = 4

    key = jax.random.PRNGKey(0)
    key, k_params = jax.random.split(key)
    params = init_params(k_params, observation_space, buffer_length, action_space)

    # batch=2  : latency-bound serving path (single 16-row tile)
    # batch=300: balanced single tile (pads to 304 rows, not 512)
    # batch=640: two 320-row tiles on the "parallel" axis (v7x dual-TC path)
    for batch in (2, 300, 640):
        key, k_obs = jax.random.split(key)
        obs = jax.random.normal(
            k_obs, (batch, buffer_length, observation_space), jnp.float32)

        mean, var = actor_forward(obs, params, action_space)
        jax.block_until_ready((mean, var))

        mean_ref, var_ref = actor_reference(obs, params, action_space)
        assert mean.shape == (batch, action_space)
        assert var.shape == (batch, action_space)
        # Kernel and reference share bf16-rounded matmul inputs; the kernel
        # additionally rounds the final slab to bf16 (<= ~0.4% rel).
        assert jnp.allclose(mean, mean_ref, atol=2e-2, rtol=2e-2), batch
        assert jnp.allclose(var, var_ref, atol=2e-2, rtol=2e-2), batch

    print("KERNEL_OK")
</pallas_src>

<mosaic_0001>
module attributes {stable_mosaic.version = 11 : i64} {
  func.func @actor_kernel(%arg0: i32, %arg1: memref<16x32xf32, #tpu.memory_space<vmem>>, %arg2: memref<896x128xbf16, #tpu.memory_space<vmem>>, %arg3: memref<4x512xf32, #tpu.memory_space<vmem>>, %arg4: memref<16x128xbf16, #tpu.memory_space<vmem>>) attributes {dimension_semantics = [#tpu.dimension_semantics<parallel>], iteration_bounds = array<i64: 1>, scalar_prefetch = 0 : i64, scratch_operands = 0 : i64, tpu.core_type = #tpu.core_type<tc>, window_params = [{transform_indices = @transform_0, window_bounds = array<i64: 16, 32>}, {pipeline_mode = #tpu.pipeline_mode<synchronous>, transform_indices = @transform_1, window_bounds = array<i64: 896, 128>}, {pipeline_mode = #tpu.pipeline_mode<synchronous>, transform_indices = @transform_2, window_bounds = array<i64: 4, 512>}, {transform_indices = @transform_3, window_bounds = array<i64: 16, 128>}]} {
    %c0 = arith.constant 0 : index
    %c0_0 = arith.constant 0 : index
    %0 = vector.load %arg1[%c0, %c0_0] : memref<16x32xf32, #tpu.memory_space<vmem>>, vector<16x32xf32>
    %1 = arith.truncf %0 : vector<16x32xf32> to vector<16x32xbf16>
    %c1 = arith.constant 1 : index
    %c0_1 = arith.constant 0 : index
    %2 = vector.load %arg3[%c1, %c0_1] : memref<4x512xf32, #tpu.memory_space<vmem>>, vector<1x128xf32>
    %c0_2 = arith.constant 0 : index
    %c0_3 = arith.constant 0 : index
    %3 = vector.load %arg2[%c0_2, %c0_3] : memref<896x128xbf16, #tpu.memory_space<vmem>>, vector<32x128xbf16>
    %cst = arith.constant dense<0.000000e+00> : vector<16x128xf32>
    %4 = tpu.matmul %1, %3, %cst {dimension_numbers = #tpu.dot_dimension_numbers<[1], [0], [0], [1], [0, 0, 1, 1], [], []>} : vector<16x32xbf16>, vector<32x128xbf16>, vector<16x128xf32> -> vector<16x128xf32>
    %c0_4 = arith.constant 0 : index
    %c0_5 = arith.constant 0 : index
    %5 = vector.load %arg3[%c0_4, %c0_5] : memref<4x512xf32, #tpu.memory_space<vmem>>, vector<1x128xf32>
    %6 = vector.broadcast %5 : vector<1x128xf32> to vector<16x128xf32>
    %7 = arith.addf %4, %6 : vector<16x128xf32>
    %cst_6 = arith.constant 0.000000e+00 : f32
    %8 = vector.broadcast %cst_6 : f32 to vector<16x128xf32>
    %9 = arith.cmpf oge, %7, %8 : vector<16x128xf32>
    %cst_7 = arith.constant 2.000000e-01 : f32
    %10 = vector.broadcast %cst_7 : f32 to vector<16x128xf32>
    %11 = arith.mulf %10, %7 : vector<16x128xf32>
    %12 = arith.select %9, %7, %11 : vector<16x128xi1>, vector<16x128xf32>
    %13 = arith.truncf %12 : vector<16x128xf32> to vector<16x128xbf16>
    %c128 = arith.constant 128 : index
    %c0_8 = arith.constant 0 : index
    %14 = vector.load %arg2[%c128, %c0_8] : memref<896x128xbf16, #tpu.memory_space<vmem>>, vector<128x128xbf16>
    %cst_9 = arith.constant dense<0.000000e+00> : vector<16x128xf32>
    %15 = tpu.matmul %13, %14, %cst_9 {dimension_numbers = #tpu.dot_dimension_numbers<[1], [0], [0], [1], [0, 0, 1, 1], [], []>} : vector<16x128xbf16>, vector<128x128xbf16>, vector<16x128xf32> -> vector<16x128xf32>
    %16 = vector.broadcast %2 : vector<1x128xf32> to vector<16x128xf32>
    %17 = arith.addf %16, %15 : vector<16x128xf32>
    %c32 = arith.constant 32 : index
    %c0_10 = arith.constant 0 : index
    %18 = vector.load %arg2[%c32, %c0_10] : memref<896x128xbf16, #tpu.memory_space<vmem>>, vector<32x128xbf16>
    %cst_11 = arith.constant dense<0.000000e+00> : vector<16x128xf32>
    %19 = tpu.matmul %1, %18, %cst_11 {dimension_numbers = #tpu.dot_dimension_numbers<[1], [0], [0], [1], [0, 0, 1, 1], [], []>} : vector<16x32xbf16>, vector<32x128xbf16>, vector<16x128xf32> -> vector<16x128xf32>
    %c0_12 = arith.constant 0 : index
    %c128_13 = arith.constant 128 : index
    %20 = vector.load %arg3[%c0_12, %c128_13] : memref<4x512xf32, #tpu.memory_space<vmem>>, vector<1x128xf32>
    %21 = vector.broadcast %20 : vector<1x128xf32> to vector<16x128xf32>
    %22 = arith.addf %19, %21 : vector<16x128xf32>
    %cst_14 = arith.constant 0.000000e+00 : f32
    %23 = vector.broadcast %cst_14 : f32 to vector<16x128xf32>
    %24 = arith.cmpf oge, %22, %23 : vector<16x128xf32>
    %cst_15 = arith.constant 2.000000e-01 : f32
    %25 = vector.broadcast %cst_15 : f32 to vector<16x128xf32>
    %26 = arith.mulf %25, %22 : vector<16x128xf32>
    %27 = arith.select %24, %22, %26 : vector<16x128xi1>, vector<16x128xf32>
    %28 = arith.truncf %27 : vector<16x128xf32> to vector<16x128xbf16>
    %c256 = arith.constant 256 : index
    %c0_16 = arith.constant 0 : index
    %29 = vector.load %arg2[%c256, %c0_16] : memref<896x128xbf16, #tpu.memory_space<vmem>>, vector<128x128xbf16>
    %cst_17 = arith.constant dense<0.000000e+00> : vector<16x128xf32>
    %30 = tpu.matmul %28, %29, %cst_17 {dimension_numbers = #tpu.dot_dimension_numbers<[1], [0], [0], [1], [0, 0, 1, 1], [], []>} : vector<16x128xbf16>, vector<128x128xbf16>, vector<16x128xf32> -> vector<16x128xf32>
    %31 = arith.addf %17, %30 : vector<16x128xf32>
    %c64 = arith.constant 64 : index
    %c0_18 = arith.constant 0 : index
    %32 = vector.load %arg2[%c64, %c0_18] : memref<896x128xbf16, #tpu.memory_space<vmem>>, vector<32x128xbf16>
    %cst_19 = arith.constant dense<0.000000e+00> : vector<16x128xf32>
    %33 = tpu.matmul %1, %32, %cst_19 {dimension_numbers = #tpu.dot_dimension_numbers<[1], [0], [0], [1], [0, 0, 1, 1], [], []>} : vector<16x32xbf16>, vector<32x128xbf16>, vector<16x128xf32> -> vector<16x128xf32>
    %c0_20 = arith.constant 0 : index
    %c256_21 = arith.constant 256 : index
    %34 = vector.load %arg3[%c0_20, %c256_21] : memref<4x512xf32, #tpu.memory_space<vmem>>, vector<1x128xf32>
    %35 = vector.broadcast %34 : vector<1x128xf32> to vector<16x128xf32>
    %36 = arith.addf %33, %35 : vector<16x128xf32>
    %cst_22 = arith.constant 0.000000e+00 : f32
    %37 = vector.broadcast %cst_22 : f32 to vector<16x128xf32>
    %38 = arith.cmpf oge, %36, %37 : vector<16x128xf32>
    %cst_23 = arith.constant 2.000000e-01 : f32
    %39 = vector.broadcast %cst_23 : f32 to vector<16x128xf32>
    %40 = arith.mulf %39, %36 : vector<16x128xf32>
    %41 = arith.select %38, %36, %40 : vector<16x128xi1>, vector<16x128xf32>
    %42 = arith.truncf %41 : vector<16x128xf32> to vector<16x128xbf16>
    %c384 = arith.constant 384 : index
    %c0_24 = arith.constant 0 : index
    %43 = vector.load %arg2[%c384, %c0_24] : memref<896x128xbf16, #tpu.memory_space<vmem>>, vector<128x128xbf16>
    %cst_25 = arith.constant dense<0.000000e+00> : vector<16x128xf32>
    %44 = tpu.matmul %42, %43, %cst_25 {dimension_numbers = #tpu.dot_dimension_numbers<[1], [0], [0], [1], [0, 0, 1, 1], [], []>} : vector<16x128xbf16>, vector<128x128xbf16>, vector<16x128xf32> -> vector<16x128xf32>
    %45 = arith.addf %31, %44 : vector<16x128xf32>
    %c96 = arith.constant 96 : index
    %c0_26 = arith.constant 0 : index
    %46 = vector.load %arg2[%c96, %c0_26] : memref<896x128xbf16, #tpu.memory_space<vmem>>, vector<32x128xbf16>
    %cst_27 = arith.constant dense<0.000000e+00> : vector<16x128xf32>
    %47 = tpu.matmul %1, %46, %cst_27 {dimension_numbers = #tpu.dot_dimension_numbers<[1], [0], [0], [1], [0, 0, 1, 1], [], []>} : vector<16x32xbf16>, vector<32x128xbf16>, vector<16x128xf32> -> vector<16x128xf32>
    %c0_28 = arith.constant 0 : index
    %c384_29 = arith.constant 384 : index
    %48 = vector.load %arg3[%c0_28, %c384_29] : memref<4x512xf32, #tpu.memory_space<vmem>>, vector<1x128xf32>
    %49 = vector.broadcast %48 : vector<1x128xf32> to vector<16x128xf32>
    %50 = arith.addf %47, %49 : vector<16x128xf32>
    %cst_30 = arith.constant 0.000000e+00 : f32
    %51 = vector.broadcast %cst_30 : f32 to vector<16x128xf32>
    %52 = arith.cmpf oge, %50, %51 : vector<16x128xf32>
    %cst_31 = arith.constant 2.000000e-01 : f32
    %53 = vector.broadcast %cst_31 : f32 to vector<16x128xf32>
    %54 = arith.mulf %53, %50 : vector<16x128xf32>
    %55 = arith.select %52, %50, %54 : vector<16x128xi1>, vector<16x128xf32>
    %56 = arith.truncf %55 : vector<16x128xf32> to vector<16x128xbf16>
    %c512 = arith.constant 512 : index
    %c0_32 = arith.constant 0 : index
    %57 = vector.load %arg2[%c512, %c0_32] : memref<896x128xbf16, #tpu.memory_space<vmem>>, vector<128x128xbf16>
    %cst_33 = arith.constant dense<0.000000e+00> : vector<16x128xf32>
    %58 = tpu.matmul %56, %57, %cst_33 {dimension_numbers = #tpu.dot_dimension_numbers<[1], [0], [0], [1], [0, 0, 1, 1], [], []>} : vector<16x128xbf16>, vector<128x128xbf16>, vector<16x128xf32> -> vector<16x128xf32>
    %59 = arith.addf %45, %58 : vector<16x128xf32>
    %cst_34 = arith.constant 0.000000e+00 : f32
    %60 = vector.broadcast %cst_34 : f32 to vector<16x128xf32>
    %61 = arith.cmpf oge, %59, %60 : vector<16x128xf32>
    %cst_35 = arith.constant 2.000000e-01 : f32
    %62 = vector.broadcast %cst_35 : f32 to vector<16x128xf32>
    %63 = arith.mulf %62, %59 : vector<16x128xf32>
    %64 = arith.select %61, %59, %63 : vector<16x128xi1>, vector<16x128xf32>
    %65 = arith.truncf %64 : vector<16x128xf32> to vector<16x128xbf16>
    %c640 = arith.constant 640 : index
    %c0_36 = arith.constant 0 : index
    %66 = vector.load %arg2[%c640, %c0_36] : memref<896x128xbf16, #tpu.memory_space<vmem>>, vector<128x128xbf16>
    %cst_37 = arith.constant dense<0.000000e+00> : vector<16x128xf32>
    %67 = tpu.matmul %65, %66, %cst_37 {dimension_numbers = #tpu.dot_dimension_numbers<[1], [0], [0], [1], [0, 0, 1, 1], [], []>} : vector<16x128xbf16>, vector<128x128xbf16>, vector<16x128xf32> -> vector<16x128xf32>
    %c2 = arith.constant 2 : index
    %c0_38 = arith.constant 0 : index
    %68 = vector.load %arg3[%c2, %c0_38] : memref<4x512xf32, #tpu.memory_space<vmem>>, vector<1x128xf32>
    %69 = vector.broadcast %68 : vector<1x128xf32> to vector<16x128xf32>
    %70 = arith.addf %67, %69 : vector<16x128xf32>
    %cst_39 = arith.constant 0.000000e+00 : f32
    %71 = vector.broadcast %cst_39 : f32 to vector<16x128xf32>
    %72 = arith.cmpf oge, %70, %71 : vector<16x128xf32>
    %cst_40 = arith.constant 2.000000e-01 : f32
    %73 = vector.broadcast %cst_40 : f32 to vector<16x128xf32>
    %74 = arith.mulf %73, %70 : vector<16x128xf32>
    %75 = arith.select %72, %70, %74 : vector<16x128xi1>, vector<16x128xf32>
    %76 = arith.truncf %75 : vector<16x128xf32> to vector<16x128xbf16>
    %c768 = arith.constant 768 : index
    %c0_41 = arith.constant 0 : index
    %77 = vector.load %arg2[%c768, %c0_41] : memref<896x128xbf16, #tpu.memory_space<vmem>>, vector<128x128xbf16>
    %cst_42 = arith.constant dense<0.000000e+00> : vector<16x128xf32>
    %78 = tpu.matmul %76, %77, %cst_42 {dimension_numbers = #tpu.dot_dimension_numbers<[1], [0], [0], [1], [0, 0, 1, 1], [], []>} : vector<16x128xbf16>, vector<128x128xbf16>, vector<16x128xf32> -> vector<16x128xf32>
    %c3 = arith.constant 3 : index
    %c0_43 = arith.constant 0 : index
    %79 = vector.load %arg3[%c3, %c0_43] : memref<4x512xf32, #tpu.memory_space<vmem>>, vector<1x128xf32>
    %80 = vector.broadcast %79 : vector<1x128xf32> to vector<16x128xf32>
    %81 = arith.addf %78, %80 : vector<16x128xf32>
    %82 = tpu.iota {dimensions = array<i32: 1>} : vector<16x128xi32>
    %c4_i32 = arith.constant 4 : i32
    %83 = vector.broadcast %c4_i32 : i32 to vector<16x128xi32>
    %84 = arith.cmpi sge, %82, %83 : vector<16x128xi32>
    %c8_i32 = arith.constant 8 : i32
    %85 = vector.broadcast %c8_i32 : i32 to vector<16x128xi32>
    %86 = arith.cmpi slt, %82, %85 : vector<16x128xi32>
    %87 = arith.andi %84, %86 : vector<16x128xi1>
    %88 = arith.negf %81 : vector<16x128xf32>
    %89 = math.exp %88 : vector<16x128xf32>
    %cst_44 = arith.constant 1.000000e+00 : f32
    %90 = vector.broadcast %cst_44 : f32 to vector<16x128xf32>
    %91 = arith.addf %90, %89 : vector<16x128xf32>
    %92 = arith.divf %90, %91 : vector<16x128xf32>
    %93 = arith.select %87, %92, %81 : vector<16x128xi1>, vector<16x128xf32>
    %94 = arith.truncf %93 : vector<16x128xf32> to vector<16x128xbf16>
    %c0_45 = arith.constant 0 : index
    %c0_46 = arith.constant 0 : index
    %95 = vector.load %arg4[%c0_45, %c0_46] : memref<16x128xbf16, #tpu.memory_space<vmem>>, vector<16x128xbf16>
    tpu.vector_store %arg4[%c0_45, %c0_46], %94 {strides = array<i32>} : memref<16x128xbf16, #tpu.memory_space<vmem>>, vector<16x128xbf16>,
    return
  }
  func.func @transform_0(%arg0: i32) -> (i32, i32) {
    %c0_i32 = arith.constant 0 : i32
    %c0_i32_0 = arith.constant 0 : i32
    return %arg0, %c0_i32 : i32, i32
  }
  func.func @transform_1(%arg0: i32) -> (i32, i32) {
    %c0_i32 = arith.constant 0 : i32
    %c0_i32_0 = arith.constant 0 : i32
    %c0_i32_1 = arith.constant 0 : i32
    return %c0_i32, %c0_i32_0 : i32, i32
  }
  func.func @transform_2(%arg0: i32) -> (i32, i32) {
    %c0_i32 = arith.constant 0 : i32
    %c0_i32_0 = arith.constant 0 : i32
    %c0_i32_1 = arith.constant 0 : i32
    return %c0_i32, %c0_i32_0 : i32, i32
  }
  func.func @transform_3(%arg0: i32) -> (i32, i32) {
    %c0_i32 = arith.constant 0 : i32
    %c0_i32_0 = arith.constant 0 : i32
    return %arg0, %c0_i32 : i32, i32
  }
}

</mosaic_0001>

<llo_original>
// kernel: tpu_custom_call.1
$region0: #{tpu_custom_call.1}
  #allocation0 [shape = 'u32[]', space=smem, size = 0x4, offset = 0x4, fixed_abs, tag = 'smem constant byte address 0x4 - core index']
  #allocation1 [shape = 'u32[144,128]{1,0:T(1,128)}', space=vmem, size = 0x12000, scoped, tag = 'internal scratch']
  %s0 = inlined_call_operand.hbm [shape: f32[16,32], index: 0, kind: input, shape index: {}]
  %s1 = inlined_call_operand.hbm [shape: bf16[896,128], index: 1, kind: input, shape index: {}]
  %s2 = inlined_call_operand.hbm [shape: f32[4,512], index: 2, kind: input, shape index: {}]
  %s3 = inlined_call_operand.hbm [shape: bf16[16,128], index: 3, kind: output, shape index: {}]
  %s4 = sld [smem:[#allocation0]]
  $region34: #{tpu_custom_call.1} parent=0
    _
  %s6 = ssub.s32 1, %s4
  %s7 = scalar_select 0, %s6, %s4
  $region1: #{tpu_custom_call.1} parent=0
    #allocation2 [shape = 'u8[8192]{0}', space=vmem, size = 0x2000, scoped, tag = 'input window, operand 0, single buffered']
    #allocation3 [shape = 's32[1]{0}', space=sflag, size = 0x4, scoped, tag = 'scoped memory for tpu_custom_call.1']
    #allocation4 [shape = 's32[1]{0}', space=sflag, size = 0x4, scoped, tag = 'scoped memory for tpu_custom_call.1']
    #allocation5 [shape = 'u8[229376]{0}', space=vmem, size = 0x38000, scoped, tag = 'input window, operand 1, single buffered']
    #allocation6 [shape = 's32[1]{0}', space=sflag, size = 0x4, scoped, tag = 'scoped memory for tpu_custom_call.1']
    #allocation7 [shape = 'u8[8192]{0}', space=vmem, size = 0x2000, scoped, tag = 'input window, operand 2, single buffered']
    #allocation8 [shape = 'u8[4096]{0}', space=vmem, size = 0x1000, scoped, tag = 'output window, operand 0, single buffered']
    %8 = vsyncpa [#allocation3], 0
    %9 = vsyncpa [#allocation6], 0
    %10 = vsyncpa [#allocation4], 0
    // Predicated region
    $region2: #{tpu_custom_call.1} parent=1 // pred_check
      _
    $region3: #{tpu_custom_call.1} parent=1 // pred_check_branch
      %12 = sbr.rel (0) target = $region5
    $region4: #{tpu_custom_call.1} parent=1 // pred_region
      %s14 = ssub.s32 256, 256
      %15 = vsyncadd [#allocation3], %s14
      %s16 = sshll.u32 [#allocation2], 4
      %s17 = int_to_ptr.vmem [resolvable:$true] %s16
      %22 = dma.hbm_to_vmem [thread:$0]  %s0, 256, %s17, [#allocation3], 128, 128, 8
    $region5: #{tpu_custom_call.1} parent=1 // pred_fallthru
      _
    // Predicated region
    $region6: #{tpu_custom_call.1} parent=1 // pred_check
      _
    $region7: #{tpu_custom_call.1} parent=1 // pred_check_branch
      %24 = sbr.rel (0) target = $region9
    $region8: #{tpu_custom_call.1} parent=1 // pred_region
      %s26 = ssub.s32 7168, 7168
      %27 = vsyncadd [#allocation6], %s26
      %s28 = sshll.u32 [#allocation5], 4
      %s29 = int_to_ptr.vmem [resolvable:$true] %s28
      %34 = dma.hbm_to_vmem [thread:$0]  %s1, 7168, %s29, [#allocation6], 64, 64, 4
    $region9: #{tpu_custom_call.1} parent=1 // pred_fallthru
      _
    // Predicated region
    $region10: #{tpu_custom_call.1} parent=1 // pred_check
      _
    $region11: #{tpu_custom_call.1} parent=1 // pred_check_branch
      %36 = sbr.rel (0) target = $region13
    $region12: #{tpu_custom_call.1} parent=1 // pred_region
      %s38 = ssub.s32 256, 256
      %39 = vsyncadd [#allocation6], %s38
      %s41 = sshll.u32 [#allocation7], 4
      %s42 = int_to_ptr.vmem [resolvable:$true] %s41
      %44 = dma.hbm_to_vmem [thread:$0]  %s2, 256, %s42, [#allocation6]
    $region13: #{tpu_custom_call.1} parent=1 // pred_fallthru
      _
    // Predicated region
    $region14: #{tpu_custom_call.1} parent=1 // pred_check
      _
    $region15: #{tpu_custom_call.1} parent=1 // pred_check_branch
      %46 = sbr.rel (0) target = $region17
    $region16: #{tpu_custom_call.1} parent=1 // pred_region
      %47 = dma.done [#allocation3], 256
    $region17: #{tpu_custom_call.1} parent=1 // pred_fallthru
      _
    // Predicated region
    $region18: #{tpu_custom_call.1} parent=1 // pred_check
      _
    $region19: #{tpu_custom_call.1} parent=1 // pred_check_branch
      %49 = sbr.rel (0) target = $region21
    $region20: #{tpu_custom_call.1} parent=1 // pred_region
      %50 = dma.done [#allocation6], 7168
    $region21: #{tpu_custom_call.1} parent=1 // pred_fallthru
      _
    // Predicated region
    $region22: #{tpu_custom_call.1} parent=1 // pred_check
      _
    $region23: #{tpu_custom_call.1} parent=1 // pred_check_branch
      %52 = sbr.rel (0) target = $region25
    $region24: #{tpu_custom_call.1} parent=1 // pred_region
      %53 = dma.done [#allocation6], 256
    $region25: #{tpu_custom_call.1} parent=1 // pred_fallthru
      _
    %v55 = vld [vmem:[#allocation2] sm:$0xff]
    %v56 = vld [vmem:[#allocation2 + $0x8] sm:$0xff]
    %v57 = vpack.c.bf16 %v56, %v55
    %v58 = vld [vmem:[#allocation7 + $0x1] sm:$0x1]
    %v59 = vld [vmem:[#allocation5] sm:$0xf]
    %v60 = vld [vmem:[#allocation5 + $0x4] sm:$0xf]
    %v61 = vld [vmem:[#allocation5 + $0x8] sm:$0xf]
    %v62 = vld [vmem:[#allocation5 + $0xc] sm:$0xf]
    %v63 = vld [vmem:[#allocation7] sm:$0x1]
    %v64 = vlaneseq
    %v65 = vshrl.u32 %v64, 7
    %v66 = vsub.s32 0, %v65
    %v67 = vrot.slane %v63, %v66
    %v72 = vunpack.c.l.b16 %v59
    %v73 = vunpack.c.l.b16 %v60
    %v74 = vunpack.c.l.b16 %v61
    %v75 = vunpack.c.l.b16 %v62
    %v76 = vpack.c.b16 %v73, %v72
    %v77 = vpack.c.b16 %v75, %v74
    %vm80 = vcmask 261120
    %v82 = vsel %vm80, %v57, 0
    %84 = vmatprep.subr.bf16.mxu0 0
    %85 = vmatpush1.bf16.msra.mxu0 %v76
    %86 = vmatprep.subr.bf16.mxu0 0
    %87 = vmatpush1.bf16.msra.mxu0 %v77
    %88 = vmatprep.subr.bf16.mxu0 0
    %89 = vmatpush1.bf16.msra.mxu0 0
    %90 = vmatprep.subr.bf16.mxu0 0
    %91 = vmatpush1.bf16.msra.mxu0 0
    %92 = vmatprep.subr.bf16.mxu0 0
    %93 = vmatpush1.bf16.msra.mxu0 0
    %94 = vmatprep.subr.bf16.mxu0 0
    %95 = vmatpush1.bf16.msra.mxu0 0
    %96 = vmatprep.subr.bf16.mxu0 0
    %97 = vmatpush1.bf16.msra.mxu0 0
    %98 = vmatprep.subr.bf16.mxu0 0
    %99 = vmatpush1.bf16.msra.mxu0 0
    %100 = vmatprep.subr.bf16.mxu0 0
    %101 = vmatpush1.bf16.msra.mxu0 0
    %102 = vmatprep.subr.bf16.mxu0 0
    %103 = vmatpush1.bf16.msra.mxu0 0
    %104 = vmatprep.subr.bf16.mxu0 0
    %105 = vmatpush1.bf16.msra.mxu0 0
    %106 = vmatprep.subr.bf16.mxu0 0
    %107 = vmatpush1.bf16.msra.mxu0 0
    %108 = vmatprep.subr.bf16.mxu0 0
    %109 = vmatpush1.bf16.msra.mxu0 0
    %110 = vmatprep.subr.bf16.mxu0 0
    %111 = vmatpush1.bf16.msra.mxu0 0
    %112 = vmatprep.subr.bf16.mxu0 0
    %113 = vmatpush1.bf16.msra.mxu0 0
    %114 = vmatprep.subr.bf16.mxu0 0
    %115 = vmatpush1.bf16.msra.mxu0 0
    %116 = vmatprep.mubr.bf16.mxu0 0
    %117 = vmatmul.mubr.bf16.gmra.mrb[0].mxu0 %v82
    %v118 = vpop.f32.mrb[0].mxu0
    %v119 = vadd.f32 %v67, %v118
    %v120 = vpop.f32.mrb[0].mxu0
    %v121 = vpop.f32.mrb[0].mxu0
    %v122 = vadd.f32 %v67, %v121
    %v123 = vpop.f32.mrb[0].mxu0
    %124 = vdwg.mxu0
    %vm125 = vcmp.ge.f32.partialorder %v119, 0.0
    %vm126 = vcmp.ge.f32.partialorder %v122, 0.0
    %v127 = vmul.f32 %v119, 0.2
    %v128 = vmul.f32 %v122, 0.2
    %v129 = vsel %vm125, %v119, %v127
    %v130 = vsel %vm126, %v122, %v128
    %v131 = vpack.c.bf16 %v130, %v129
    %v132 = vld [vmem:[#allocation5 + $0x40] sm:$0xf]
    %v133 = vld [vmem:[#allocation5 + $0x44] sm:$0xf]
    %v134 = vld [vmem:[#allocation5 + $0x48] sm:$0xf]
    %v135 = vld [vmem:[#allocation5 + $0x4c] sm:$0xf]
    %v136 = vld [vmem:[#allocation5 + $0x50] sm:$0xf]
    %v137 = vld [vmem:[#allocation5 + $0x54] sm:$0xf]
    %v138 = vld [vmem:[#allocation5 + $0x58] sm:$0xf]
    %v139 = vld [vmem:[#allocation5 + $0x5c] sm:$0xf]
    %v140 = vld [vmem:[#allocation5 + $0x60] sm:$0xf]
    %v141 = vld [vmem:[#allocation5 + $0x64] sm:$0xf]
    %v142 = vld [vmem:[#allocation5 + $0x68] sm:$0xf]
    %v143 = vld [vmem:[#allocation5 + $0x6c] sm:$0xf]
    %v144 = vld [vmem:[#allocation5 + $0x70] sm:$0xf]
    %v145 = vld [vmem:[#allocation5 + $0x74] sm:$0xf]
    %v146 = vld [vmem:[#allocation5 + $0x78] sm:$0xf]
    %v147 = vld [vmem:[#allocation5 + $0x7c] sm:$0xf]
    %v164 = vunpack.c.l.b16 %v132
    %v165 = vunpack.c.l.b16 %v133
    %v166 = vunpack.c.l.b16 %v134
    %v167 = vunpack.c.l.b16 %v135
    %v168 = vunpack.c.l.b16 %v136
    %v169 = vunpack.c.l.b16 %v137
    %v170 = vunpack.c.l.b16 %v138
    %v171 = vunpack.c.l.b16 %v139
    %v172 = vunpack.c.l.b16 %v140
    %v173 = vunpack.c.l.b16 %v141
    %v174 = vunpack.c.l.b16 %v142
    %v175 = vunpack.c.l.b16 %v143
    %v176 = vunpack.c.l.b16 %v144
    %v177 = vunpack.c.l.b16 %v145
    %v178 = vunpack.c.l.b16 %v146
    %v179 = vunpack.c.l.b16 %v147
    %v180 = vpack.c.b16 %v165, %v164
    %v181 = vpack.c.b16 %v167, %v166
    %v182 = vpack.c.b16 %v169, %v168
    %v183 = vpack.c.b16 %v171, %v170
    %v184 = vpack.c.b16 %v173, %v172
    %v185 = vpack.c.b16 %v175, %v174
    %v186 = vpack.c.b16 %v177, %v176
    %v187 = vpack.c.b16 %v179, %v178
    %196 = vmatprep.subr.bf16.mxu0 0
    %197 = vmatpush1.bf16.msra.mxu0 %v180
    %198 = vmatprep.subr.bf16.mxu0 0
    %199 = vmatpush1.bf16.msra.mxu0 %v181
    %200 = vmatprep.subr.bf16.mxu0 0
    %201 = vmatpush1.bf16.msra.mxu0 %v182
    %202 = vmatprep.subr.bf16.mxu0 0
    %203 = vmatpush1.bf16.msra.mxu0 %v183
    %204 = vmatprep.subr.bf16.mxu0 0
    %205 = vmatpush1.bf16.msra.mxu0 %v184
    %206 = vmatprep.subr.bf16.mxu0 0
    %207 = vmatpush1.bf16.msra.mxu0 %v185
    %208 = vmatprep.subr.bf16.mxu0 0
    %209 = vmatpush1.bf16.msra.mxu0 %v186
    %210 = vmatprep.subr.bf16.mxu0 0
    %211 = vmatpush1.bf16.msra.mxu0 %v187
    %212 = vmatprep.subr.bf16.mxu0 0
    %213 = vmatpush1.bf16.msra.mxu0 0
    %214 = vmatprep.subr.bf16.mxu0 0
    %215 = vmatpush1.bf16.msra.mxu0 0
    %216 = vmatprep.subr.bf16.mxu0 0
    %217 = vmatpush1.bf16.msra.mxu0 0
    %218 = vmatprep.subr.bf16.mxu0 0
    %219 = vmatpush1.bf16.msra.mxu0 0
    %220 = vmatprep.subr.bf16.mxu0 0
    %221 = vmatpush1.bf16.msra.mxu0 0
    %222 = vmatprep.subr.bf16.mxu0 0
    %223 = vmatpush1.bf16.msra.mxu0 0
    %224 = vmatprep.subr.bf16.mxu0 0
    %225 = vmatpush1.bf16.msra.mxu0 0
    %226 = vmatprep.subr.bf16.mxu0 0
    %227 = vmatpush1.bf16.msra.mxu0 0
    %228 = vmatprep.mubr.bf16.mxu0 0
    %229 = vmatmul.mubr.bf16.gmra.mrb[0].mxu0 %v131
    %v230 = vpop.f32.mrb[0].mxu0
    %v231 = vadd.f32 0.0, %v230
    %v232 = vpop.f32.mrb[0].mxu0
    %v233 = vpop.f32.mrb[0].mxu0
    %v234 = vadd.f32 0.0, %v233
    %v235 = vpop.f32.mrb[0].mxu0
    %236 = vdwg.mxu0
    %v237 = vlaneseq
    %v238 = vshrl.u32 %v237, 7
    %v239 = vsub.s32 0, %v238
    %v240 = vrot.slane %v58, %v239
    %v241 = vadd.f32 %v240, %v231
    %v242 = vadd.f32 %v240, %v234
    %v243 = vld [vmem:[#allocation5 + $0x10] sm:$0xf]
    %v244 = vld [vmem:[#allocation5 + $0x14] sm:$0xf]
    %v245 = vld [vmem:[#allocation5 + $0x18] sm:$0xf]
    %v246 = vld [vmem:[#allocation5 + $0x1c] sm:$0xf]
    %v247 = vld [vmem:[#allocation7 + $0x4] sm:$0x1]
    %v248 = vlaneseq
    %v249 = vshrl.u32 %v248, 7
    %v250 = vsub.s32 0, %v249
    %v251 = vrot.slane %v247, %v250
    %v256 = vunpack.c.l.b16 %v243
    %v257 = vunpack.c.l.b16 %v244
    %v258 = vunpack.c.l.b16 %v245
    %v259 = vunpack.c.l.b16 %v246
    %v260 = vpack.c.b16 %v257, %v256
    %v261 = vpack.c.b16 %v259, %v258
    %264 = vmatprep.subr.bf16.mxu0 0
    %265 = vmatpush1.bf16.msra.mxu0 %v260
    %266 = vmatprep.subr.bf16.mxu0 0
    %267 = vmatpush1.bf16.msra.mxu0 %v261
    %268 = vmatprep.subr.bf16.mxu0 0
    %269 = vmatpush1.bf16.msra.mxu0 0
    %270 = vmatprep.subr.bf16.mxu0 0
    %271 = vmatpush1.bf16.msra.mxu0 0
    %272 = vmatprep.subr.bf16.mxu0 0
    %273 = vmatpush1.bf16.msra.mxu0 0
    %274 = vmatprep.subr.bf16.mxu0 0
    %275 = vmatpush1.bf16.msra.mxu0 0
    %276 = vmatprep.subr.bf16.mxu0 0
    %277 = vmatpush1.bf16.msra.mxu0 0
    %278 = vmatprep.subr.bf16.mxu0 0
    %279 = vmatpush1.bf16.msra.mxu0 0
    %280 = vmatprep.subr.bf16.mxu0 0
    %281 = vmatpush1.bf16.msra.mxu0 0
    %282 = vmatprep.subr.bf16.mxu0 0
    %283 = vmatpush1.bf16.msra.mxu0 0
    %284 = vmatprep.subr.bf16.mxu0 0
    %285 = vmatpush1.bf16.msra.mxu0 0
    %286 = vmatprep.subr.bf16.mxu0 0
    %287 = vmatpush1.bf16.msra.mxu0 0
    %288 = vmatprep.subr.bf16.mxu0 0
    %289 = vmatpush1.bf16.msra.mxu0 0
    %290 = vmatprep.subr.bf16.mxu0 0
    %291 = vmatpush1.bf16.msra.mxu0 0
    %292 = vmatprep.subr.bf16.mxu0 0
    %293 = vmatpush1.bf16.msra.mxu0 0
    %294 = vmatprep.subr.bf16.mxu0 0
    %295 = vmatpush1.bf16.msra.mxu0 0
    %296 = vmatprep.mubr.bf16.mxu0 0
    %297 = vmatmul.mubr.bf16.gmra.mrb[0].mxu0 %v82
    %v298 = vpop.f32.mrb[0].mxu0
    %v299 = vadd.f32 %v251, %v298
    %v300 = vpop.f32.mrb[0].mxu0
    %v301 = vpop.f32.mrb[0].mxu0
    %v302 = vadd.f32 %v251, %v301
    %v303 = vpop.f32.mrb[0].mxu0
    %304 = vdwg.mxu0
    %vm305 = vcmp.ge.f32.partialorder %v299, 0.0
    %vm306 = vcmp.ge.f32.partialorder %v302, 0.0
    %v307 = vmul.f32 %v299, 0.2
    %v308 = vmul.f32 %v302, 0.2
    %v309 = vsel %vm305, %v299, %v307
    %v310 = vsel %vm306, %v302, %v308
    %v311 = vpack.c.bf16 %v310, %v309
    %v312 = vld [vmem:[#allocation5 + $0x80] sm:$0xf]
    %v313 = vld [vmem:[#allocation5 + $0x84] sm:$0xf]
    %v314 = vld [vmem:[#allocation5 + $0x88] sm:$0xf]
    %v315 = vld [vmem:[#allocation5 + $0x8c] sm:$0xf]
    %v316 = vld [vmem:[#allocation5 + $0x90] sm:$0xf]
    %v317 = vld [vmem:[#allocation5 + $0x94] sm:$0xf]
    %v318 = vld [vmem:[#allocation5 + $0x98] sm:$0xf]
    %v319 = vld [vmem:[#allocation5 + $0x9c] sm:$0xf]
    %v320 = vld [vmem:[#allocation5 + $0xa0] sm:$0xf]
    %v321 = vld [vmem:[#allocation5 + $0xa4] sm:$0xf]
    %v322 = vld [vmem:[#allocation5 + $0xa8] sm:$0xf]
    %v323 = vld [vmem:[#allocation5 + $0xac] sm:$0xf]
    %v324 = vld [vmem:[#allocation5 + $0xb0] sm:$0xf]
    %v325 = vld [vmem:[#allocation5 + $0xb4] sm:$0xf]
    %v326 = vld [vmem:[#allocation5 + $0xb8] sm:$0xf]
    %v327 = vld [vmem:[#allocation5 + $0xbc] sm:$0xf]
    %v344 = vunpack.c.l.b16 %v312
    %v345 = vunpack.c.l.b16 %v313
    %v346 = vunpack.c.l.b16 %v314
    %v347 = vunpack.c.l.b16 %v315
    %v348 = vunpack.c.l.b16 %v316
    %v349 = vunpack.c.l.b16 %v317
    %v350 = vunpack.c.l.b16 %v318
    %v351 = vunpack.c.l.b16 %v319
    %v352 = vunpack.c.l.b16 %v320
    %v353 = vunpack.c.l.b16 %v321
    %v354 = vunpack.c.l.b16 %v322
    %v355 = vunpack.c.l.b16 %v323
    %v356 = vunpack.c.l.b16 %v324
    %v357 = vunpack.c.l.b16 %v325
    %v358 = vunpack.c.l.b16 %v326
    %v359 = vunpack.c.l.b16 %v327
    %v360 = vpack.c.b16 %v345, %v344
    %v361 = vpack.c.b16 %v347, %v346
    %v362 = vpack.c.b16 %v349, %v348
    %v363 = vpack.c.b16 %v351, %v350
    %v364 = vpack.c.b16 %v353, %v352
    %v365 = vpack.c.b16 %v355, %v354
    %v366 = vpack.c.b16 %v357, %v356
    %v367 = vpack.c.b16 %v359, %v358
    %376 = vmatprep.subr.bf16.mxu0 0
    %377 = vmatpush1.bf16.msra.mxu0 %v360
    %378 = vmatprep.subr.bf16.mxu0 0
    %379 = vmatpush1.bf16.msra.mxu0 %v361
    %380 = vmatprep.subr.bf16.mxu0 0
    %381 = vmatpush1.bf16.msra.mxu0 %v362
    %382 = vmatprep.subr.bf16.mxu0 0
    %383 = vmatpush1.bf16.msra.mxu0 %v363
    %384 = vmatprep.subr.bf16.mxu0 0
    %385 = vmatpush1.bf16.msra.mxu0 %v364
    %386 = vmatprep.subr.bf16.mxu0 0
    %387 = vmatpush1.bf16.msra.mxu0 %v365
    %388 = vmatprep.subr.bf16.mxu0 0
    %389 = vmatpush1.bf16.msra.mxu0 %v366
    %390 = vmatprep.subr.bf16.mxu0 0
    %391 = vmatpush1.bf16.msra.mxu0 %v367
    %392 = vmatprep.subr.bf16.mxu0 0
    %393 = vmatpush1.bf16.msra.mxu0 0
    %394 = vmatprep.subr.bf16.mxu0 0
    %395 = vmatpush1.bf16.msra.mxu0 0
    %396 = vmatprep.subr.bf16.mxu0 0
    %397 = vmatpush1.bf16.msra.mxu0 0
    %398 = vmatprep.subr.bf16.mxu0 0
    %399 = vmatpush1.bf16.msra.mxu0 0
    %400 = vmatprep.subr.bf16.mxu0 0
    %401 = vmatpush1.bf16.msra.mxu0 0
    %402 = vmatprep.subr.bf16.mxu0 0
    %403 = vmatpush1.bf16.msra.mxu0 0
    %404 = vmatprep.subr.bf16.mxu0 0
    %405 = vmatpush1.bf16.msra.mxu0 0
    %406 = vmatprep.subr.bf16.mxu0 0
    %407 = vmatpush1.bf16.msra.mxu0 0
    %408 = vmatprep.mubr.bf16.mxu0 0
    %409 = vmatmul.mubr.bf16.gmra.mrb[0].mxu0 %v311
    %v410 = vpop.f32.mrb[0].mxu0
    %v411 = vadd.f32 0.0, %v410
    %v412 = vpop.f32.mrb[0].mxu0
    %v413 = vpop.f32.mrb[0].mxu0
    %v414 = vadd.f32 0.0, %v413
    %v415 = vpop.f32.mrb[0].mxu0
    %416 = vdwg.mxu0
    %v417 = vadd.f32 %v241, %v411
    %v418 = vadd.f32 %v242, %v414
    %v419 = vld [vmem:[#allocation5 + $0x20] sm:$0xf]
    %v420 = vld [vmem:[#allocation5 + $0x24] sm:$0xf]
    %v421 = vld [vmem:[#allocation5 + $0x28] sm:$0xf]
    %v422 = vld [vmem:[#allocation5 + $0x2c] sm:$0xf]
    %v423 = vld [vmem:[#allocation7 + $0x8] sm:$0x1]
    %v424 = vlaneseq
    %v425 = vshrl.u32 %v424, 7
    %v426 = vsub.s32 0, %v425
    %v427 = vrot.slane %v423, %v426
    %v432 = vunpack.c.l.b16 %v419
    %v433 = vunpack.c.l.b16 %v420
    %v434 = vunpack.c.l.b16 %v421
    %v435 = vunpack.c.l.b16 %v422
    %v436 = vpack.c.b16 %v433, %v432
    %v437 = vpack.c.b16 %v435, %v434
    %440 = vmatprep.subr.bf16.mxu0 0
    %441 = vmatpush1.bf16.msra.mxu0 %v436
    %442 = vmatprep.subr.bf16.mxu0 0
    %443 = vmatpush1.bf16.msra.mxu0 %v437
    %444 = vmatprep.subr.bf16.mxu0 0
    %445 = vmatpush1.bf16.msra.mxu0 0
    %446 = vmatprep.subr.bf16.mxu0 0
    %447 = vmatpush1.bf16.msra.mxu0 0
    %448 = vmatprep.subr.bf16.mxu0 0
    %449 = vmatpush1.bf16.msra.mxu0 0
    %450 = vmatprep.subr.bf16.mxu0 0
    %451 = vmatpush1.bf16.msra.mxu0 0
    %452 = vmatprep.subr.bf16.mxu0 0
    %453 = vmatpush1.bf16.msra.mxu0 0
    %454 = vmatprep.subr.bf16.mxu0 0
    %455 = vmatpush1.bf16.msra.mxu0 0
    %456 = vmatprep.subr.bf16.mxu0 0
    %457 = vmatpush1.bf16.msra.mxu0 0
    %458 = vmatprep.subr.bf16.mxu0 0
    %459 = vmatpush1.bf16.msra.mxu0 0
    %460 = vmatprep.subr.bf16.mxu0 0
    %461 = vmatpush1.bf16.msra.mxu0 0
    %462 = vmatprep.subr.bf16.mxu0 0
    %463 = vmatpush1.bf16.msra.mxu0 0
    %464 = vmatprep.subr.bf16.mxu0 0
    %465 = vmatpush1.bf16.msra.mxu0 0
    %466 = vmatprep.subr.bf16.mxu0 0
    %467 = vmatpush1.bf16.msra.mxu0 0
    %468 = vmatprep.subr.bf16.mxu0 0
    %469 = vmatpush1.bf16.msra.mxu0 0
    %470 = vmatprep.subr.bf16.mxu0 0
    %471 = vmatpush1.bf16.msra.mxu0 0
    %472 = vmatprep.mubr.bf16.mxu0 0
    %473 = vmatmul.mubr.bf16.gmra.mrb[0].mxu0 %v82
    %v474 = vpop.f32.mrb[0].mxu0
    %v475 = vadd.f32 %v427, %v474
    %v476 = vpop.f32.mrb[0].mxu0
    %v477 = vpop.f32.mrb[0].mxu0
    %v478 = vadd.f32 %v427, %v477
    %v479 = vpop.f32.mrb[0].mxu0
    %480 = vdwg.mxu0
    %vm481 = vcmp.ge.f32.partialorder %v475, 0.0
    %vm482 = vcmp.ge.f32.partialorder %v478, 0.0
    %v483 = vmul.f32 %v475, 0.2
    %v484 = vmul.f32 %v478, 0.2
    %v485 = vsel %vm481, %v475, %v483
    %v486 = vsel %vm482, %v478, %v484
    %v487 = vpack.c.bf16 %v486, %v485
    %v488 = vld [vmem:[#allocation5 + $0xc0] sm:$0xf]
    %v489 = vld [vmem:[#allocation5 + $0xc4] sm:$0xf]
    %v490 = vld [vmem:[#allocation5 + $0xc8] sm:$0xf]
    %v491 = vld [vmem:[#allocation5 + $0xcc] sm:$0xf]
    %v492 = vld [vmem:[#allocation5 + $0xd0] sm:$0xf]
    %v493 = vld [vmem:[#allocation5 + $0xd4] sm:$0xf]
    %v494 = vld [vmem:[#allocation5 + $0xd8] sm:$0xf]
    %v495 = vld [vmem:[#allocation5 + $0xdc] sm:$0xf]
    %v496 = vld [vmem:[#allocation5 + $0xe0] sm:$0xf]
    %v497 = vld [vmem:[#allocation5 + $0xe4] sm:$0xf]
    %v498 = vld [vmem:[#allocation5 + $0xe8] sm:$0xf]
    %v499 = vld [vmem:[#allocation5 + $0xec] sm:$0xf]
    %v500 = vld [vmem:[#allocation5 + $0xf0] sm:$0xf]
    %v501 = vld [vmem:[#allocation5 + $0xf4] sm:$0xf]
    %v502 = vld [vmem:[#allocation5 + $0xf8] sm:$0xf]
    %v503 = vld [vmem:[#allocation5 + $0xfc] sm:$0xf]
    %v520 = vunpack.c.l.b16 %v488
    %v521 = vunpack.c.l.b16 %v489
    %v522 = vunpack.c.l.b16 %v490
    %v523 = vunpack.c.l.b16 %v491
    %v524 = vunpack.c.l.b16 %v492
    %v525 = vunpack.c.l.b16 %v493
    %v526 = vunpack.c.l.b16 %v494
    %v527 = vunpack.c.l.b16 %v495
    %v528 = vunpack.c.l.b16 %v496
    %v529 = vunpack.c.l.b16 %v497
    %v530 = vunpack.c.l.b16 %v498
    %v531 = vunpack.c.l.b16 %v499
    %v532 = vunpack.c.l.b16 %v500
    %v533 = vunpack.c.l.b16 %v501
    %v534 = vunpack.c.l.b16 %v502
    %v535 = vunpack.c.l.b16 %v503
    %v536 = vpack.c.b16 %v521, %v520
    %v537 = vpack.c.b16 %v523, %v522
    %v538 = vpack.c.b16 %v525, %v524
    %v539 = vpack.c.b16 %v527, %v526
    %v540 = vpack.c.b16 %v529, %v528
    %v541 = vpack.c.b16 %v531, %v530
    %v542 = vpack.c.b16 %v533, %v532
    %v543 = vpack.c.b16 %v535, %v534
    %552 = vmatprep.subr.bf16.mxu0 0
    %553 = vmatpush1.bf16.msra.mxu0 %v536
    %554 = vmatprep.subr.bf16.mxu0 0
    %555 = vmatpush1.bf16.msra.mxu0 %v537
    %556 = vmatprep.subr.bf16.mxu0 0
    %557 = vmatpush1.bf16.msra.mxu0 %v538
    %558 = vmatprep.subr.bf16.mxu0 0
    %559 = vmatpush1.bf16.msra.mxu0 %v539
    %560 = vmatprep.subr.bf16.mxu0 0
    %561 = vmatpush1.bf16.msra.mxu0 %v540
    %562 = vmatprep.subr.bf16.mxu0 0
    %563 = vmatpush1.bf16.msra.mxu0 %v541
    %564 = vmatprep.subr.bf16.mxu0 0
    %565 = vmatpush1.bf16.msra.mxu0 %v542
    %566 = vmatprep.subr.bf16.mxu0 0
    %567 = vmatpush1.bf16.msra.mxu0 %v543
    %568 = vmatprep.subr.bf16.mxu0 0
    %569 = vmatpush1.bf16.msra.mxu0 0
    %570 = vmatprep.subr.bf16.mxu0 0
    %571 = vmatpush1.bf16.msra.mxu0 0
    %572 = vmatprep.subr.bf16.mxu0 0
    %573 = vmatpush1.bf16.msra.mxu0 0
    %574 = vmatprep.subr.bf16.mxu0 0
    %575 = vmatpush1.bf16.msra.mxu0 0
    %576 = vmatprep.subr.bf16.mxu0 0
    %577 = vmatpush1.bf16.msra.mxu0 0
    %578 = vmatprep.subr.bf16.mxu0 0
    %579 = vmatpush1.bf16.msra.mxu0 0
    %580 = vmatprep.subr.bf16.mxu0 0
    %581 = vmatpush1.bf16.msra.mxu0 0
    %582 = vmatprep.subr.bf16.mxu0 0
    %583 = vmatpush1.bf16.msra.mxu0 0
    %584 = vmatprep.mubr.bf16.mxu0 0
    %585 = vmatmul.mubr.bf16.gmra.mrb[0].mxu0 %v487
    %v586 = vpop.f32.mrb[0].mxu0
    %v587 = vadd.f32 0.0, %v586
    %v588 = vpop.f32.mrb[0].mxu0
    %v589 = vpop.f32.mrb[0].mxu0
    %v590 = vadd.f32 0.0, %v589
    %v591 = vpop.f32.mrb[0].mxu0
    %592 = vdwg.mxu0
    %v593 = vadd.f32 %v417, %v587
    %v594 = vadd.f32 %v418, %v590
    %v595 = vld [vmem:[#allocation5 + $0x30] sm:$0xf]
    %v596 = vld [vmem:[#allocation5 + $0x34] sm:$0xf]
    %v597 = vld [vmem:[#allocation5 + $0x38] sm:$0xf]
    %v598 = vld [vmem:[#allocation5 + $0x3c] sm:$0xf]
    %v599 = vld [vmem:[#allocation7 + $0xc] sm:$0x1]
    %v600 = vlaneseq
    %v601 = vshrl.u32 %v600, 7
    %v602 = vsub.s32 0, %v601
    %v603 = vrot.slane %v599, %v602
    %v608 = vunpack.c.l.b16 %v595
    %v609 = vunpack.c.l.b16 %v596
    %v610 = vunpack.c.l.b16 %v597
    %v611 = vunpack.c.l.b16 %v598
    %v612 = vpack.c.b16 %v609, %v608
    %v613 = vpack.c.b16 %v611, %v610
    %616 = vmatprep.subr.bf16.mxu0 0
    %617 = vmatpush1.bf16.msra.mxu0 %v612
    %618 = vmatprep.subr.bf16.mxu0 0
    %619 = vmatpush1.bf16.msra.mxu0 %v613
    %620 = vmatprep.subr.bf16.mxu0 0
    %621 = vmatpush1.bf16.msra.mxu0 0
    %622 = vmatprep.subr.bf16.mxu0 0
    %623 = vmatpush1.bf16.msra.mxu0 0
    %624 = vmatprep.subr.bf16.mxu0 0
    %625 = vmatpush1.bf16.msra.mxu0 0
    %626 = vmatprep.subr.bf16.mxu0 0
    %627 = vmatpush1.bf16.msra.mxu0 0
    %628 = vmatprep.subr.bf16.mxu0 0
    %629 = vmatpush1.bf16.msra.mxu0 0
    %630 = vmatprep.subr.bf16.mxu0 0
    %631 = vmatpush1.bf16.msra.mxu0 0
    %632 = vmatprep.subr.bf16.mxu0 0
    %633 = vmatpush1.bf16.msra.mxu0 0
    %634 = vmatprep.subr.bf16.mxu0 0
    %635 = vmatpush1.bf16.msra.mxu0 0
    %636 = vmatprep.subr.bf16.mxu0 0
    %637 = vmatpush1.bf16.msra.mxu0 0
    %638 = vmatprep.subr.bf16.mxu0 0
    %639 = vmatpush1.bf16.msra.mxu0 0
    %640 = vmatprep.subr.bf16.mxu0 0
    %641 = vmatpush1.bf16.msra.mxu0 0
    %642 = vmatprep.subr.bf16.mxu0 0
    %643 = vmatpush1.bf16.msra.mxu0 0
    %644 = vmatprep.subr.bf16.mxu0 0
    %645 = vmatpush1.bf16.msra.mxu0 0
    %646 = vmatprep.subr.bf16.mxu0 0
    %647 = vmatpush1.bf16.msra.mxu0 0
    %648 = vmatprep.mubr.bf16.mxu0 0
    %649 = vmatmul.mubr.bf16.gmra.mrb[0].mxu0 %v82
    %v650 = vpop.f32.mrb[0].mxu0
    %v651 = vadd.f32 %v603, %v650
    %v652 = vpop.f32.mrb[0].mxu0
    %v653 = vpop.f32.mrb[0].mxu0
    %v654 = vadd.f32 %v603, %v653
    %v655 = vpop.f32.mrb[0].mxu0
    %656 = vdwg.mxu0
    %vm657 = vcmp.ge.f32.partialorder %v651, 0.0
    %vm658 = vcmp.ge.f32.partialorder %v654, 0.0
    %v659 = vmul.f32 %v651, 0.2
    %v660 = vmul.f32 %v654, 0.2
    %v661 = vsel %vm657, %v651, %v659
    %v662 = vsel %vm658, %v654, %v660
    %v663 = vpack.c.bf16 %v662, %v661
    %v664 = vld [vmem:[#allocation5 + $0x100] sm:$0xf]
    %v665 = vld [vmem:[#allocation5 + $0x104] sm:$0xf]
    %v666 = vld [vmem:[#allocation5 + $0x108] sm:$0xf]
    %v667 = vld [vmem:[#allocation5 + $0x10c] sm:$0xf]
    %v668 = vld [vmem:[#allocation5 + $0x110] sm:$0xf]
    %v669 = vld [vmem:[#allocation5 + $0x114] sm:$0xf]
    %v670 = vld [vmem:[#allocation5 + $0x118] sm:$0xf]
    %v671 = vld [vmem:[#allocation5 + $0x11c] sm:$0xf]
    %v672 = vld [vmem:[#allocation5 + $0x120] sm:$0xf]
    %v673 = vld [vmem:[#allocation5 + $0x124] sm:$0xf]
    %v674 = vld [vmem:[#allocation5 + $0x128] sm:$0xf]
    %v675 = vld [vmem:[#allocation5 + $0x12c] sm:$0xf]
    %v676 = vld [vmem:[#allocation5 + $0x130] sm:$0xf]
    %v677 = vld [vmem:[#allocation5 + $0x134] sm:$0xf]
    %v678 = vld [vmem:[#allocation5 + $0x138] sm:$0xf]
    %v679 = vld [vmem:[#allocation5 + $0x13c] sm:$0xf]
    %v696 = vunpack.c.l.b16 %v664
    %v697 = vunpack.c.l.b16 %v665
    %v698 = vunpack.c.l.b16 %v666
    %v699 = vunpack.c.l.b16 %v667
    %v700 = vunpack.c.l.b16 %v668
    %v701 = vunpack.c.l.b16 %v669
    %v702 = vunpack.c.l.b16 %v670
    %v703 = vunpack.c.l.b16 %v671
    %v704 = vunpack.c.l.b16 %v672
    %v705 = vunpack.c.l.b16 %v673
    %v706 = vunpack.c.l.b16 %v674
    %v707 = vunpack.c.l.b16 %v675
    %v708 = vunpack.c.l.b16 %v676
    %v709 = vunpack.c.l.b16 %v677
    %v710 = vunpack.c.l.b16 %v678
    %v711 = vunpack.c.l.b16 %v679
    %v712 = vpack.c.b16 %v697, %v696
    %v713 = vpack.c.b16 %v699, %v698
    %v714 = vpack.c.b16 %v701, %v700
    %v715 = vpack.c.b16 %v703, %v702
    %v716 = vpack.c.b16 %v705, %v704
    %v717 = vpack.c.b16 %v707, %v706
    %v718 = vpack.c.b16 %v709, %v708
    %v719 = vpack.c.b16 %v711, %v710
    %728 = vmatprep.subr.bf16.mxu0 0
    %729 = vmatpush1.bf16.msra.mxu0 %v712
    %730 = vmatprep.subr.bf16.mxu0 0
    %731 = vmatpush1.bf16.msra.mxu0 %v713
    %732 = vmatprep.subr.bf16.mxu0 0
    %733 = vmatpush1.bf16.msra.mxu0 %v714
    %734 = vmatprep.subr.bf16.mxu0 0
    %735 = vmatpush1.bf16.msra.mxu0 %v715
    %736 = vmatprep.subr.bf16.mxu0 0
    %737 = vmatpush1.bf16.msra.mxu0 %v716
    %738 = vmatprep.subr.bf16.mxu0 0
    %739 = vmatpush1.bf16.msra.mxu0 %v717
    %740 = vmatprep.subr.bf16.mxu0 0
    %741 = vmatpush1.bf16.msra.mxu0 %v718
    %742 = vmatprep.subr.bf16.mxu0 0
    %743 = vmatpush1.bf16.msra.mxu0 %v719
    %744 = vmatprep.subr.bf16.mxu0 0
    %745 = vmatpush1.bf16.msra.mxu0 0
    %746 = vmatprep.subr.bf16.mxu0 0
    %747 = vmatpush1.bf16.msra.mxu0 0
    %748 = vmatprep.subr.bf16.mxu0 0
    %749 = vmatpush1.bf16.msra.mxu0 0
    %750 = vmatprep.subr.bf16.mxu0 0
    %751 = vmatpush1.bf16.msra.mxu0 0
    %752 = vmatprep.subr.bf16.mxu0 0
    %753 = vmatpush1.bf16.msra.mxu0 0
    %754 = vmatprep.subr.bf16.mxu0 0
    %755 = vmatpush1.bf16.msra.mxu0 0
    %756 = vmatprep.subr.bf16.mxu0 0
    %757 = vmatpush1.bf16.msra.mxu0 0
    %758 = vmatprep.subr.bf16.mxu0 0
    %759 = vmatpush1.bf16.msra.mxu0 0
    %760 = vmatprep.mubr.bf16.mxu0 0
    %761 = vmatmul.mubr.bf16.gmra.mrb[0].mxu0 %v663
    %v762 = vpop.f32.mrb[0].mxu0
    %v763 = vadd.f32 0.0, %v762
    %v764 = vpop.f32.mrb[0].mxu0
    %v765 = vpop.f32.mrb[0].mxu0
    %v766 = vadd.f32 0.0, %v765
    %v767 = vpop.f32.mrb[0].mxu0
    %768 = vdwg.mxu0
    %v769 = vadd.f32 %v593, %v763
    %v770 = vadd.f32 %v594, %v766
    %vm771 = vcmp.ge.f32.partialorder %v769, 0.0
    %vm772 = vcmp.ge.f32.partialorder %v770, 0.0
    %v773 = vmul.f32 %v769, 0.2
    %v774 = vmul.f32 %v770, 0.2
    %v775 = vsel %vm771, %v769, %v773
    %v776 = vsel %vm772, %v770, %v774
    %v777 = vpack.c.bf16 %v776, %v775
    %v778 = vld [vmem:[#allocation5 + $0x140] sm:$0xf]
    %v779 = vld [vmem:[#allocation5 + $0x144] sm:$0xf]
    %v780 = vld [vmem:[#allocation5 + $0x148] sm:$0xf]
    %v781 = vld [vmem:[#allocation5 + $0x14c] sm:$0xf]
    %v782 = vld [vmem:[#allocation5 + $0x150] sm:$0xf]
    %v783 = vld [vmem:[#allocation5 + $0x154] sm:$0xf]
    %v784 = vld [vmem:[#allocation5 + $0x158] sm:$0xf]
    %v785 = vld [vmem:[#allocation5 + $0x15c] sm:$0xf]
    %v786 = vld [vmem:[#allocation5 + $0x160] sm:$0xf]
    %v787 = vld [vmem:[#allocation5 + $0x164] sm:$0xf]
    %v788 = vld [vmem:[#allocation5 + $0x168] sm:$0xf]
    %v789 = vld [vmem:[#allocation5 + $0x16c] sm:$0xf]
    %v790 = vld [vmem:[#allocation5 + $0x170] sm:$0xf]
    %v791 = vld [vmem:[#allocation5 + $0x174] sm:$0xf]
    %v792 = vld [vmem:[#allocation5 + $0x178] sm:$0xf]
    %v793 = vld [vmem:[#allocation5 + $0x17c] sm:$0xf]
    %v794 = vld [vmem:[#allocation7 + $0x2] sm:$0x1]
    %v795 = vlaneseq
    %v796 = vshrl.u32 %v795, 7
    %v797 = vsub.s32 0, %v796
    %v798 = vrot.slane %v794, %v797
    %v815 = vunpack.c.l.b16 %v778
    %v816 = vunpack.c.l.b16 %v779
    %v817 = vunpack.c.l.b16 %v780
    %v818 = vunpack.c.l.b16 %v781
    %v819 = vunpack.c.l.b16 %v782
    %v820 = vunpack.c.l.b16 %v783
    %v821 = vunpack.c.l.b16 %v784
    %v822 = vunpack.c.l.b16 %v785
    %v823 = vunpack.c.l.b16 %v786
    %v824 = vunpack.c.l.b16 %v787
    %v825 = vunpack.c.l.b16 %v788
    %v826 = vunpack.c.l.b16 %v789
    %v827 = vunpack.c.l.b16 %v790
    %v828 = vunpack.c.l.b16 %v791
    %v829 = vunpack.c.l.b16 %v792
    %v830 = vunpack.c.l.b16 %v793
    %v831 = vpack.c.b16 %v816, %v815
    %v832 = vpack.c.b16 %v818, %v817
    %v833 = vpack.c.b16 %v820, %v819
    %v834 = vpack.c.b16 %v822, %v821
    %v835 = vpack.c.b16 %v824, %v823
    %v836 = vpack.c.b16 %v826, %v825
    %v837 = vpack.c.b16 %v828, %v827
    %v838 = vpack.c.b16 %v830, %v829
    %847 = vmatprep.subr.bf16.mxu0 0
    %848 = vmatpush1.bf16.msra.mxu0 %v831
    %849 = vmatprep.subr.bf16.mxu0 0
    %850 = vmatpush1.bf16.msra.mxu0 %v832
    %851 = vmatprep.subr.bf16.mxu0 0
    %852 = vmatpush1.bf16.msra.mxu0 %v833
    %853 = vmatprep.subr.bf16.mxu0 0
    %854 = vmatpush1.bf16.msra.mxu0 %v834
    %855 = vmatprep.subr.bf16.mxu0 0
    %856 = vmatpush1.bf16.msra.mxu0 %v835
    %857 = vmatprep.subr.bf16.mxu0 0
    %858 = vmatpush1.bf16.msra.mxu0 %v836
    %859 = vmatprep.subr.bf16.mxu0 0
    %860 = vmatpush1.bf16.msra.mxu0 %v837
    %861 = vmatprep.subr.bf16.mxu0 0
    %862 = vmatpush1.bf16.msra.mxu0 %v838
    %863 = vmatprep.subr.bf16.mxu0 0
    %864 = vmatpush1.bf16.msra.mxu0 0
    %865 = vmatprep.subr.bf16.mxu0 0
    %866 = vmatpush1.bf16.msra.mxu0 0
    %867 = vmatprep.subr.bf16.mxu0 0
    %868 = vmatpush1.bf16.msra.mxu0 0
    %869 = vmatprep.subr.bf16.mxu0 0
    %870 = vmatpush1.bf16.msra.mxu0 0
    %871 = vmatprep.subr.bf16.mxu0 0
    %872 = vmatpush1.bf16.msra.mxu0 0
    %873 = vmatprep.subr.bf16.mxu0 0
    %874 = vmatpush1.bf16.msra.mxu0 0
    %875 = vmatprep.subr.bf16.mxu0 0
    %876 = vmatpush1.bf16.msra.mxu0 0
    %877 = vmatprep.subr.bf16.mxu0 0
    %878 = vmatpush1.bf16.msra.mxu0 0
    %879 = vmatprep.mubr.bf16.mxu0 0
    %880 = vmatmul.mubr.bf16.gmra.mrb[0].mxu0 %v777
    %v881 = vpop.f32.mrb[0].mxu0
    %v882 = vadd.f32 %v798, %v881
    %v883 = vpop.f32.mrb[0].mxu0
    %v884 = vpop.f32.mrb[0].mxu0
    %v885 = vadd.f32 %v798, %v884
    %v886 = vpop.f32.mrb[0].mxu0
    %887 = vdwg.mxu0
    %vm888 = vcmp.ge.f32.partialorder %v882, 0.0
    %vm889 = vcmp.ge.f32.partialorder %v885, 0.0
    %v890 = vmul.f32 %v882, 0.2
    %v891 = vmul.f32 %v885, 0.2
    %v892 = vsel %vm888, %v882, %v890
    %v893 = vsel %vm889, %v885, %v891
    %v894 = vpack.c.bf16 %v893, %v892
    %v895 = vld [vmem:[#allocation5 + $0x180] sm:$0xf]
    %v896 = vld [vmem:[#allocation5 + $0x184] sm:$0xf]
    %v897 = vld [vmem:[#allocation5 + $0x188] sm:$0xf]
    %v898 = vld [vmem:[#allocation5 + $0x18c] sm:$0xf]
    %v899 = vld [vmem:[#allocation5 + $0x190] sm:$0xf]
    %v900 = vld [vmem:[#allocation5 + $0x194] sm:$0xf]
    %v901 = vld [vmem:[#allocation5 + $0x198] sm:$0xf]
    %v902 = vld [vmem:[#allocation5 + $0x19c] sm:$0xf]
    %v903 = vld [vmem:[#allocation5 + $0x1a0] sm:$0xf]
    %v904 = vld [vmem:[#allocation5 + $0x1a4] sm:$0xf]
    %v905 = vld [vmem:[#allocation5 + $0x1a8] sm:$0xf]
    %v906 = vld [vmem:[#allocation5 + $0x1ac] sm:$0xf]
    %v907 = vld [vmem:[#allocation5 + $0x1b0] sm:$0xf]
    %v908 = vld [vmem:[#allocation5 + $0x1b4] sm:$0xf]
    %v909 = vld [vmem:[#allocation5 + $0x1b8] sm:$0xf]
    %v910 = vld [vmem:[#allocation5 + $0x1bc] sm:$0xf]
    %v911 = vld [vmem:[#allocation7 + $0x3] sm:$0x1]
    %v912 = vlaneseq
    %v913 = vshrl.u32 %v912, 7
    %v914 = vsub.s32 0, %v913
    %v915 = vrot.slane %v911, %v914
    %v932 = vunpack.c.l.b16 %v895
    %v933 = vunpack.c.l.b16 %v896
    %v934 = vunpack.c.l.b16 %v897
    %v935 = vunpack.c.l.b16 %v898
    %v936 = vunpack.c.l.b16 %v899
    %v937 = vunpack.c.l.b16 %v900
    %v938 = vunpack.c.l.b16 %v901
    %v939 = vunpack.c.l.b16 %v902
    %v940 = vunpack.c.l.b16 %v903
    %v941 = vunpack.c.l.b16 %v904
    %v942 = vunpack.c.l.b16 %v905
    %v943 = vunpack.c.l.b16 %v906
    %v944 = vunpack.c.l.b16 %v907
    %v945 = vunpack.c.l.b16 %v908
    %v946 = vunpack.c.l.b16 %v909
    %v947 = vunpack.c.l.b16 %v910
    %v948 = vpack.c.b16 %v933, %v932
    %v949 = vpack.c.b16 %v935, %v934
    %v950 = vpack.c.b16 %v937, %v936
    %v951 = vpack.c.b16 %v939, %v938
    %v952 = vpack.c.b16 %v941, %v940
    %v953 = vpack.c.b16 %v943, %v942
    %v954 = vpack.c.b16 %v945, %v944
    %v955 = vpack.c.b16 %v947, %v946
    %964 = vmatprep.subr.bf16.mxu0 0
    %965 = vmatpush1.bf16.msra.mxu0 %v948
    %966 = vmatprep.subr.bf16.mxu0 0
    %967 = vmatpush1.bf16.msra.mxu0 %v949
    %968 = vmatprep.subr.bf16.mxu0 0
    %969 = vmatpush1.bf16.msra.mxu0 %v950
    %970 = vmatprep.subr.bf16.mxu0 0
    %971 = vmatpush1.bf16.msra.mxu0 %v951
    %972 = vmatprep.subr.bf16.mxu0 0
    %973 = vmatpush1.bf16.msra.mxu0 %v952
    %974 = vmatprep.subr.bf16.mxu0 0
    %975 = vmatpush1.bf16.msra.mxu0 %v953
    %976 = vmatprep.subr.bf16.mxu0 0
    %977 = vmatpush1.bf16.msra.mxu0 %v954
    %978 = vmatprep.subr.bf16.mxu0 0
    %979 = vmatpush1.bf16.msra.mxu0 %v955
    %980 = vmatprep.subr.bf16.mxu0 0
    %981 = vmatpush1.bf16.msra.mxu0 0
    %982 = vmatprep.subr.bf16.mxu0 0
    %983 = vmatpush1.bf16.msra.mxu0 0
    %984 = vmatprep.subr.bf16.mxu0 0
    %985 = vmatpush1.bf16.msra.mxu0 0
    %986 = vmatprep.subr.bf16.mxu0 0
    %987 = vmatpush1.bf16.msra.mxu0 0
    %988 = vmatprep.subr.bf16.mxu0 0
    %989 = vmatpush1.bf16.msra.mxu0 0
    %990 = vmatprep.subr.bf16.mxu0 0
    %991 = vmatpush1.bf16.msra.mxu0 0
    %992 = vmatprep.subr.bf16.mxu0 0
    %993 = vmatpush1.bf16.msra.mxu0 0
    %994 = vmatprep.subr.bf16.mxu0 0
    %995 = vmatpush1.bf16.msra.mxu0 0
    %996 = vmatprep.mubr.bf16.mxu0 0
    %997 = vmatmul.mubr.bf16.gmra.mrb[0].mxu0 %v894
    %v998 = vpop.f32.mrb[0].mxu0
    %v999 = vadd.f32 %v915, %v998
    %v1000 = vpop.f32.mrb[0].mxu0
    %v1001 = vpop.f32.mrb[0].mxu0
    %v1002 = vadd.f32 %v915, %v1001
    %v1003 = vpop.f32.mrb[0].mxu0
    %1004 = vdwg.mxu0
    %v1005 = vlaneseq
    %v1006 = vand.u32 %v1005, 127
    %vm1007 = vcmp.ge.s32.totalorder %v1006, 4
    %vm1008 = vcmp.lt.s32.totalorder %v1006, 8
    %vm1009 = vmand %vm1007, %vm1008
    %v1010 = vxor.u32 %v999, 2147483648
    %v1011 = vxor.u32 %v1002, 2147483648
    %v1012 = vmul.f32 %v1010, 1.442695
    %v1013 = vpow.pop %v1012
    %v1014 = vmul.f32 %v1011, 1.442695
    %v1015 = vpow.pop %v1014
    %v1016 = vadd.f32 %v1013, 1.0
    %v1017 = vadd.f32 %v1015, 1.0
    %v1018 = vrcp.pop %v1016
    %v1019 = vmul.f32 1.0, %v1018
    %v1020 = vrcp.pop %v1017
    %v1021 = vmul.f32 1.0, %v1020
    %v1022 = vsel %vm1009, %v1019, %v999
    %v1023 = vsel %vm1009, %v1021, %v1002
    %v1024 = vpack.c.bf16 %v1023, %v1022
    %v1026 = vunpack.c.l.b16 %v1024
    %v1027 = vunpack.c.h.b16 %v1024
    %v1028 = vpack.c.b16 %v1026, %v1026
    %v1029 = vpack.c.b16 %v1027, %v1027
    %1032 = vst [vmem:[#allocation8] sm:$0xf] %v1028
    %1033 = vst [vmem:[#allocation8 + $0x4] sm:$0xf] %v1029
    // Predicated region
    $region26: #{tpu_custom_call.1} parent=1 // pred_check
      _
    $region27: #{tpu_custom_call.1} parent=1 // pred_check_branch
      %1035 = sbr.rel (0) target = $region29
    $region28: #{tpu_custom_call.1} parent=1 // pred_region
      %s1037 = ssub.s32 128, 128
      %1038 = vsyncadd [#allocation4], %s1037
      %s1039 = sshll.u32 [#allocation8], 4
      %s1040 = int_to_ptr.vmem [resolvable:$true] %s1039
      %1045 = dma.vmem_to_hbm [thread:$0]  %s1040, 128, %s3, [#allocation4], 64, 64, 4
    $region29: #{tpu_custom_call.1} parent=1 // pred_fallthru
      _
    // Predicated region
    $region30: #{tpu_custom_call.1} parent=1 // pred_check
      _
    $region31: #{tpu_custom_call.1} parent=1 // pred_check_branch
      %1047 = sbr.rel (0) target = $region33
    $region32: #{tpu_custom_call.1} parent=1 // pred_region
      %1048 = dma.done [#allocation4], 128
    $region33: #{tpu_custom_call.1} parent=1 // pred_fallthru
      _
    %1049 = vsyncpa [#allocation3], 1
    %1050 = vsyncpa [#allocation6], 1
    %1051 = vsyncpa [#allocation4], 1

</llo_original>
